<compile_context>
chip_gen: v7x
topology: tpu7x:2x2x1
jax: 0.10.0
libtpu: 0.0.40
codegen_flags: <defaults>
</compile_context>

<pallas_src>
import functools
import math

import jax
import jax.numpy as jnp
from jax.experimental import pallas as pl
from jax.experimental.pallas import tpu as pltpu

_LANES = 128
_MAX_COLS = 512          # lane-dense last dim: large multiple of 128
_ROW_TILE_CAP = 1024     # 1024 x 512 f32 = 2 MiB per block
_SUBLANE = 32            # row-tile granularity valid for f32 / bf16 / int8 blocks


def _round_up(x, m):
    return ((x + m - 1) // m) * m


def _pick_block_rows(rows):
    """Row tile: multiple of 32, <= 2 MiB budget, and <= ceil(rows/2) so the
    grid has at least 2 steps (keeps both v7x TensorCores busy)."""
    if rows <= _SUBLANE:
        # Single block covering the full row extent (block dim == array dim
        # is always legal, regardless of dtype packing).
        return rows
    half = _round_up(-(-rows // 2), _SUBLANE)
    b = min(_ROW_TILE_CAP, half)
    return max(_SUBLANE, b - (b % _SUBLANE))


def _contrastive_loss_kernel(dist_ref, label_ref, out_ref, *, margin):
    # Compute in f32: the kernel is memory-bound with large VALU slack, so the
    # up-casts are free and improve parity with an f32 reference.
    d = dist_ref[...].astype(jnp.float32)
    label = label_ref[...].astype(jnp.float32)   # in-kernel cast of native-dtype labels
    clamped = jnp.clip(margin - d, 0.0, 1000.0)
    loss = label * (d * d) + (1.0 - label) * (clamped * clamped)
    out_ref[...] = loss.astype(out_ref.dtype)


def contrastive_loss(euclidean_distance, label, margin=2.0):
    """Elementwise contrastive loss (no reduction), matching the PyTorch module."""
    assert euclidean_distance.shape == label.shape
    x = euclidean_distance
    orig_shape = x.shape
    dtype = x.dtype
    total = math.prod(orig_shape) if orig_shape else 1

    if total == 0:
        return jnp.zeros(orig_shape, dtype)

    # Bool VMEM tiles are awkward; int8 is a same-width cheap conversion.
    if label.dtype == jnp.bool_:
        label = label.astype(jnp.int8)

    # --- lane-dense 2-D repacking -------------------------------------------
    cols = None
    for c in (512, 256, 128):
        if total % c == 0:
            cols = c
            break

    if cols is not None:
        # Fast path: contiguous reshape only; no pad, no output slice.
        rows = total // cols
        x2 = x.reshape(rows, cols)
        l2 = label.reshape(rows, cols)
        padded = False
    else:
        # Ragged total: pad only the tail to the next multiple of `cols`.
        cols = min(_round_up(total, _LANES), _MAX_COLS)
        padded_total = _round_up(total, cols)
        rows = padded_total // cols
        pad = padded_total - total
        x_flat = x.reshape(-1)
        l_flat = label.reshape(-1)
        if pad:
            x_flat = jnp.pad(x_flat, (0, pad))
            l_flat = jnp.pad(l_flat, (0, pad))
        x2 = x_flat.reshape(rows, cols)
        l2 = l_flat.reshape(rows, cols)
        padded = True

    block_rows = _pick_block_rows(rows)
    grid = (pl.cdiv(rows, block_rows),)       # partial last block is masked
    spec = pl.BlockSpec((block_rows, cols), lambda i: (i, 0))

    kernel = functools.partial(_contrastive_loss_kernel, margin=float(margin))

    bytes_accessed = total * (
        jnp.dtype(dtype).itemsize + jnp.dtype(l2.dtype).itemsize + jnp.dtype(dtype).itemsize
    )

    out = pl.pallas_call(
        kernel,
        out_shape=jax.ShapeDtypeStruct((rows, cols), dtype),
        grid=grid,
        in_specs=[spec, spec],
        out_specs=spec,
        compiler_params=pltpu.CompilerParams(
            dimension_semantics=("parallel",),
        ),
        cost_estimate=pl.CostEstimate(
            flops=9 * total, transcendentals=0, bytes_accessed=bytes_accessed
        ),
    )(x2, l2)

    if padded:
        return out.reshape(-1)[:total].reshape(orig_shape)
    return out.reshape(orig_shape)


def _reference(euclidean_distance, label, margin=2.0):
    clamped = jnp.clip(margin - euclidean_distance, 0.0, 1000.0)
    return label * euclidean_distance**2 + (1.0 - label) * clamped**2


if __name__ == "__main__":
    key = jax.random.PRNGKey(0)
    k1, k2, k3, k4, k5, k6 = jax.random.split(key, 6)
    margin = 2.0

    # 1-D: one distance per pair in the batch (ragged -> pad/masked path).
    B = 64
    d1 = jax.random.uniform(k1, (B,), jnp.float32, 0.0, 4.0)
    l1 = jax.random.bernoulli(k2, 0.5, (B,)).astype(jnp.float32)
    out1 = jax.block_until_ready(contrastive_loss(d1, l1, margin))
    ref1 = _reference(d1, l1, margin)
    assert out1.shape == d1.shape
    assert jnp.allclose(out1, ref1, atol=1e-5, rtol=1e-5), "mismatch vs reference (1D)"

    # 2-D lane-aligned total: fast path (no pad/slice), multi-block grid,
    # int32 labels exercising the in-kernel cast.
    d2 = jax.random.uniform(k3, (64, 512), jnp.float32, 0.0, 4.0)
    l2 = jax.random.bernoulli(k4, 0.5, (64, 512)).astype(jnp.int32)
    out2 = jax.block_until_ready(contrastive_loss(d2, l2, margin))
    ref2 = _reference(d2, l2.astype(jnp.float32), margin)
    assert out2.shape == d2.shape
    assert jnp.allclose(out2, ref2, atol=1e-5, rtol=1e-5), "mismatch vs reference (2D aligned)"

    # 2-D with a non-lane-aligned total (exercises tail padding + masked block).
    d3 = jax.random.uniform(k5, (8, 200), jnp.float32, 0.0, 4.0)
    l3 = jax.random.bernoulli(k6, 0.5, (8, 200)).astype(jnp.float32)
    out3 = jax.block_until_ready(contrastive_loss(d3, l3, margin))
    ref3 = _reference(d3, l3, margin)
    assert out3.shape == d3.shape
    assert jnp.allclose(out3, ref3, atol=1e-5, rtol=1e-5), "mismatch vs reference (2D ragged)"

    print("KERNEL_OK")
</pallas_src>

<mosaic_0001>
module attributes {stable_mosaic.version = 11 : i64} {
  func.func @_contrastive_loss_kernel(%arg0: i32, %arg1: memref<1x128xf32, #tpu.memory_space<vmem>>, %arg2: memref<1x128xf32, #tpu.memory_space<vmem>>, %arg3: memref<1x128xf32, #tpu.memory_space<vmem>>) attributes {dimension_semantics = [#tpu.dimension_semantics<parallel>], iteration_bounds = array<i64: 1>, scalar_prefetch = 0 : i64, scratch_operands = 0 : i64, tpu.core_type = #tpu.core_type<tc>, window_params = [{transform_indices = @transform_0, window_bounds = array<i64: 1, 128>}, {transform_indices = @transform_1, window_bounds = array<i64: 1, 128>}, {transform_indices = @transform_2, window_bounds = array<i64: 1, 128>}]} {
    %c0 = arith.constant 0 : index
    %c0_0 = arith.constant 0 : index
    %0 = vector.load %arg1[%c0, %c0_0] : memref<1x128xf32, #tpu.memory_space<vmem>>, vector<1x128xf32>
    %c0_1 = arith.constant 0 : index
    %c0_2 = arith.constant 0 : index
    %1 = vector.load %arg2[%c0_1, %c0_2] : memref<1x128xf32, #tpu.memory_space<vmem>>, vector<1x128xf32>
    %cst = arith.constant 2.000000e+00 : f32
    %2 = vector.broadcast %cst : f32 to vector<1x128xf32>
    %3 = arith.subf %2, %0 : vector<1x128xf32>
    %cst_3 = arith.constant 0.000000e+00 : f32
    %cst_4 = arith.constant 1.000000e+03 : f32
    %4 = vector.broadcast %cst_3 : f32 to vector<1x128xf32>
    %5 = arith.maximumf %4, %3 : vector<1x128xf32>
    %6 = vector.broadcast %cst_4 : f32 to vector<1x128xf32>
    %7 = arith.minimumf %6, %5 : vector<1x128xf32>
    %8 = arith.mulf %0, %0 : vector<1x128xf32>
    %9 = arith.mulf %1, %8 : vector<1x128xf32>
    %cst_5 = arith.constant 1.000000e+00 : f32
    %10 = vector.broadcast %cst_5 : f32 to vector<1x128xf32>
    %11 = arith.subf %10, %1 : vector<1x128xf32>
    %12 = arith.mulf %7, %7 : vector<1x128xf32>
    %13 = arith.mulf %11, %12 : vector<1x128xf32>
    %14 = arith.addf %9, %13 : vector<1x128xf32>
    %c0_6 = arith.constant 0 : index
    %c0_7 = arith.constant 0 : index
    %15 = vector.load %arg3[%c0_6, %c0_7] : memref<1x128xf32, #tpu.memory_space<vmem>>, vector<1x128xf32>
    tpu.vector_store %arg3[%c0_6, %c0_7], %14 {strides = array<i32>} : memref<1x128xf32, #tpu.memory_space<vmem>>, vector<1x128xf32>,
    return
  }
  func.func @transform_0(%arg0: i32) -> (i32, i32) {
    %c0_i32 = arith.constant 0 : i32
    %c0_i32_0 = arith.constant 0 : i32
    return %arg0, %c0_i32 : i32, i32
  }
  func.func @transform_1(%arg0: i32) -> (i32, i32) {
    %c0_i32 = arith.constant 0 : i32
    %c0_i32_0 = arith.constant 0 : i32
    return %arg0, %c0_i32 : i32, i32
  }
  func.func @transform_2(%arg0: i32) -> (i32, i32) {
    %c0_i32 = arith.constant 0 : i32
    %c0_i32_0 = arith.constant 0 : i32
    return %arg0, %c0_i32 : i32, i32
  }
}

</mosaic_0001>

<llo_original>
// kernel: tpu_custom_call.1
$region0: #{tpu_custom_call.1}
  #allocation0 [shape = 'u32[]', space=smem, size = 0x4, offset = 0x4, fixed_abs, tag = 'smem constant byte address 0x4 - core index']
  #allocation1 [shape = 'u32[144,128]{1,0:T(1,128)}', space=vmem, size = 0x12000, scoped, tag = 'internal scratch']
  %s0 = inlined_call_operand.hbm [shape: f32[1,128], index: 0, kind: input, shape index: {}]
  %s1 = inlined_call_operand.vmem [shape: f32[1,128], index: 1, kind: input, shape index: {}]
  %s2 = inlined_call_operand.hbm [shape: f32[1,128], index: 2, kind: output, shape index: {}]
  %s3 = sld [smem:[#allocation0]]
  $region22: #{tpu_custom_call.1} parent=0
    _
  %s5 = ssub.s32 1, %s3
  %s6 = scalar_select 0, %s5, %s3
  $region1: #{tpu_custom_call.1} parent=0
    #allocation2 [shape = 'u8[512]{0}', space=vmem, size = 0x400, scoped, tag = 'input window, operand 0, single buffered']
    #allocation3 [shape = 's32[1]{0}', space=sflag, size = 0x4, scoped, tag = 'scoped memory for tpu_custom_call.1']
    #allocation4 [shape = 's32[1]{0}', space=sflag, size = 0x4, scoped, tag = 'scoped memory for tpu_custom_call.1']
    #allocation5 [shape = 'u8[512]{0}', space=vmem, size = 0x400, scoped, tag = 'output window, operand 0, single buffered']
    %7 = vsyncpa [#allocation3], 0
    %8 = vsyncpa [#allocation4], 0
    // Predicated region
    $region2: #{tpu_custom_call.1} parent=1 // pred_check
      _
    $region3: #{tpu_custom_call.1} parent=1 // pred_check_branch
      %10 = sbr.rel (0) target = $region5
    $region4: #{tpu_custom_call.1} parent=1 // pred_region
      %s12 = ssub.s32 16, 16
      %13 = vsyncadd [#allocation3], %s12
      %s15 = sshll.u32 [#allocation2], 4
      %s16 = int_to_ptr.vmem [resolvable:$true] %s15
      %18 = dma.hbm_to_vmem [thread:$0]  %s0, 16, %s16, [#allocation3]
    $region5: #{tpu_custom_call.1} parent=1 // pred_fallthru
      _
    // Predicated region
    $region6: #{tpu_custom_call.1} parent=1 // pred_check
      _
    $region7: #{tpu_custom_call.1} parent=1 // pred_check_branch
      %20 = sbr.rel (0) target = $region9
    $region8: #{tpu_custom_call.1} parent=1 // pred_region
      _
    $region9: #{tpu_custom_call.1} parent=1 // pred_fallthru
      _
    // Predicated region
    $region10: #{tpu_custom_call.1} parent=1 // pred_check
      _
    $region11: #{tpu_custom_call.1} parent=1 // pred_check_branch
      %22 = sbr.rel (0) target = $region13
    $region12: #{tpu_custom_call.1} parent=1 // pred_region
      %23 = dma.done [#allocation3], 16
    $region13: #{tpu_custom_call.1} parent=1 // pred_fallthru
      _
    %v24 = vld [vmem:[#allocation2] sm:$0x1]
    %v25 = vld [vmem:[%s1] sm:$0x1]
    %v26 = vsub.f32 2.0, %v24
    %v27 = vmax.f32 %v26, 0.0
    %v28 = vmin.f32 %v27, 1000.0
    %v29 = vmul.f32 %v24, %v24
    %v30 = vmul.f32 %v25, %v29
    %v31 = vsub.f32 1.0, %v25
    %v32 = vmul.f32 %v28, %v28
    %v33 = vmul.f32 %v31, %v32
    %v34 = vadd.f32 %v30, %v33
    %35 = vst [vmem:[#allocation5] sm:$0x1] %v34
    // Predicated region
    $region14: #{tpu_custom_call.1} parent=1 // pred_check
      _
    $region15: #{tpu_custom_call.1} parent=1 // pred_check_branch
      %37 = sbr.rel (0) target = $region17
    $region16: #{tpu_custom_call.1} parent=1 // pred_region
      %s39 = ssub.s32 16, 16
      %40 = vsyncadd [#allocation4], %s39
      %s42 = sshll.u32 [#allocation5], 4
      %s43 = int_to_ptr.vmem [resolvable:$true] %s42
      %45 = dma.vmem_to_hbm [thread:$0]  %s43, 16, %s2, [#allocation4]
    $region17: #{tpu_custom_call.1} parent=1 // pred_fallthru
      _
    // Predicated region
    $region18: #{tpu_custom_call.1} parent=1 // pred_check
      _
    $region19: #{tpu_custom_call.1} parent=1 // pred_check_branch
      %47 = sbr.rel (0) target = $region21
    $region20: #{tpu_custom_call.1} parent=1 // pred_region
      %48 = dma.done [#allocation4], 16
    $region21: #{tpu_custom_call.1} parent=1 // pred_fallthru
      _
    %49 = vsyncpa [#allocation3], 1
    %50 = vsyncpa [#allocation4], 1

</llo_original>
